<compile_context>
chip_gen: v7x
topology: tpu7x:2x2x1
jax: 0.10.0
libtpu: 0.0.40
codegen_flags: <defaults>
</compile_context>

<pallas_src>
import functools
import math

import jax
import jax.numpy as jnp
from jax.experimental import pallas as pl
from jax.experimental.pallas import tpu as pltpu
from jax.scipy.special import gammaln

_LOG_2PI = math.log(2.0 * math.pi)


def _round_up(x: int, m: int) -> int:
    return (x + m - 1) // m * m


def _cdiv(a: int, b: int) -> int:
    return (a + b - 1) // b


# ----------------------------------------------------------------------------
# Pallas kernel (one batch tile)
# ----------------------------------------------------------------------------
def _actor_critic_kernel(state_ref, eps_ref, aux_ref,
                         w12_ref, b12_ref, w22_ref, b22_ref, wh_ref, bh_ref,
                         out_ref, *, at, av):
    # fused layer 1: [backbone.0 | critic.0] -> (bb, 128), tanh
    s = state_ref[...]
    h = jnp.tanh(jnp.dot(s, w12_ref[...], preferred_element_type=jnp.float32) + b12_ref[...])
    # fused layer 2: blockdiag(backbone.2, critic.2) -> (bb, 128), tanh
    h = jnp.tanh(jnp.dot(h.astype(w22_ref.dtype), w22_ref[...],
                         preferred_element_type=jnp.float32) + b22_ref[...])
    # fused heads, columns already in slab order:
    #   [mean(At) | action-preact(At, dup of wt) | lp(1, zero) | conc(Av) | value(1)]
    head = jnp.dot(h.astype(wh_ref.dtype), wh_ref[...],
                   preferred_element_type=jnp.float32) + bh_ref[...]

    eps = eps_ref[...]        # (bb, W) f32: raw eps on the action lanes, 0 elsewhere
    aux = aux_ref[...]        # (1, W)  f32: sqrt(var) on action lanes, lp_const at lane 2*at
    lane = jax.lax.broadcasted_iota(jnp.int32, head.shape, 1)

    # tanh on mean + action lanes; identity elsewhere (lp/conc/value lanes keep head).
    y = jnp.where(lane < 2 * at, jnp.tanh(head), head)
    # reparameterized Gaussian sample: + sqrt(var)*eps on the action lanes only.
    y = y + eps * aux
    # stable softplus + 0.001 on the Dirichlet-concentration lanes.
    sp = jnp.maximum(head, 0.0) + jnp.log1p(jnp.exp(-jnp.abs(head))) + 0.001
    y = jnp.where((lane >= 2 * at + 1) & (lane < 2 * at + 1 + av), sp, y)
    # diag-MVN log-prob: (a-mean)^2/var == eps^2 for the reparameterized sample.
    lp = -0.5 * jnp.sum(eps * eps, axis=-1, keepdims=True) + aux[:, 2 * at:2 * at + 1]
    y = jnp.where(lane == 2 * at, lp, y)

    out_ref[...] = y


# ----------------------------------------------------------------------------
# Parameter fusion (done once, outside the kernel)
# ----------------------------------------------------------------------------
def fuse_params(params):
    """Pack the 7 nn.Linear layers into 3 MXU-shaped weights (head in slab order)."""
    h = params["w1"].shape[1]                   # 64
    at = params["wt"].shape[1]
    av = params["wv"].shape[1]
    slab_w = 2 * at + av + 2

    w12 = jnp.concatenate([params["w1"], params["wc1"]], axis=1)           # (S, 2h)
    b12 = jnp.concatenate([params["b1"], params["bc1"]], axis=1)           # (1, 2h)
    w22 = jnp.zeros((2 * h, 2 * h), jnp.float32)
    w22 = w22.at[:h, :h].set(params["w2"]).at[h:, h:].set(params["wc2"])   # blockdiag
    b22 = jnp.concatenate([params["b2"], params["bc2"]], axis=1)           # (1, 2h)

    wh = jnp.zeros((2 * h, slab_w), jnp.float32)
    wh = wh.at[:h, :at].set(params["wt"])
    wh = wh.at[:h, at:2 * at].set(params["wt"])          # duplicated -> action pre-activation
    wh = wh.at[:h, 2 * at + 1:2 * at + 1 + av].set(params["wv"])
    wh = wh.at[h:, 2 * at + 1 + av:].set(params["wc3"])
    bh = jnp.zeros((1, slab_w), jnp.float32)
    bh = bh.at[:, :at].set(params["bt"])
    bh = bh.at[:, at:2 * at].set(params["bt"])
    bh = bh.at[:, 2 * at + 1:2 * at + 1 + av].set(params["bv"])
    bh = bh.at[:, 2 * at + 1 + av:].set(params["bc3"])
    return dict(w12=w12, b12=b12, w22=w22, b22=b22, wh=wh, bh=bh)


# ----------------------------------------------------------------------------
# Pallas wrapper
# ----------------------------------------------------------------------------
def actor_critic_act_kernel(state, eps_top, action_var, fused, *,
                            target_block_rows=1024, matmul_dtype=jnp.bfloat16):
    """Runs the Pallas kernel. Returns (top_mean, top_actions, top_logprob[B,1],
    valve_concentration, state_value)."""
    B, S = state.shape
    At = eps_top.shape[1]
    slab_w = fused["wh"].shape[1]
    Av = slab_w - 2 * At - 2

    # adaptive batch tile: ~target rows, rounded to 8 sublanes, padding waste < 1 tile,
    # and >= 2 grid steps whenever possible so both v7x TensorCores get a share.
    n_tiles = max(_cdiv(B, target_block_rows), 2 if B >= 16 else 1)
    bb = _round_up(_cdiv(B, n_tiles), 8)
    B_pad = _round_up(B, bb)
    grid = (B_pad // bb,)

    # batch-independent Gaussian constants hoisted out of the kernel, laid on slab lanes
    var = action_var.reshape(1, At).astype(jnp.float32)
    lp_const = -0.5 * At * _LOG_2PI - 0.5 * jnp.sum(jnp.log(var), axis=-1, keepdims=True)
    aux = jnp.zeros((1, slab_w), jnp.float32)
    aux = aux.at[:, At:2 * At].set(jnp.sqrt(var))
    aux = aux.at[:, 2 * At:2 * At + 1].set(lp_const)

    # eps placed directly on the action lanes of the slab (zeros elsewhere), f32 always
    eps_slab = jnp.pad(eps_top.astype(jnp.float32),
                       ((0, B_pad - B), (At, slab_w - 2 * At)))
    state_p = jnp.pad(state, ((0, B_pad - B), (0, 0))).astype(matmul_dtype)

    # matmul operands in matmul_dtype (bf16 by default); biases & elementwise stay f32
    w12 = fused["w12"].astype(matmul_dtype)
    w22 = fused["w22"].astype(matmul_dtype)
    wh = fused["wh"].astype(matmul_dtype)
    b12, b22, bh = fused["b12"], fused["b22"], fused["bh"]

    def row_spec(shape):
        return pl.BlockSpec(shape, lambda i: (i, 0))

    def const_spec(shape):
        return pl.BlockSpec(shape, lambda i: (0, 0))

    in_specs = [
        row_spec((bb, S)),                  # state (tiled over batch)
        row_spec((bb, slab_w)),             # eps on slab lanes (tiled over batch)
        const_spec((1, slab_w)),            # aux: sqrt(var) / lp_const
        const_spec(w12.shape), const_spec(b12.shape),
        const_spec(w22.shape), const_spec(b22.shape),
        const_spec(wh.shape), const_spec(bh.shape),
    ]
    out_spec = row_spec((bb, slab_w))
    out_shape = jax.ShapeDtypeStruct((B_pad, slab_w), jnp.float32)

    mm_bytes = jnp.dtype(matmul_dtype).itemsize
    param_bytes = (mm_bytes * (w12.size + w22.size + wh.size)
                   + 4 * (b12.size + b22.size + bh.size))
    # double-buffered batch tiles (state + eps in, slab out) + resident weights + slack
    tile_bytes = bb * (S * mm_bytes + 2 * slab_w * 4) + slab_w * 4
    vmem_limit = int(min(32 << 20, max(16 << 20, 2 * tile_bytes + param_bytes + (2 << 20))))

    flops = 2 * B_pad * 128 * (S + 128 + slab_w) + 12 * B_pad * slab_w
    transcendentals = B_pad * (2 * 128 + 2 * slab_w)
    # weights counted once (constant block index -> VMEM-resident across the grid)
    bytes_accessed = (B_pad * (S * mm_bytes + 2 * slab_w * 4)
                      + slab_w * 4 + param_bytes)

    kernel = functools.partial(_actor_critic_kernel, at=At, av=Av)
    slab = pl.pallas_call(
        kernel,
        out_shape=out_shape,
        grid=grid,
        in_specs=in_specs,
        out_specs=out_spec,
        compiler_params=pltpu.CompilerParams(
            dimension_semantics=("parallel",),
            vmem_limit_bytes=vmem_limit,
        ),
        cost_estimate=pl.CostEstimate(
            flops=int(flops), transcendentals=int(transcendentals),
            bytes_accessed=int(bytes_accessed)),
    )(state_p, eps_slab, aux, w12, b12, w22, b22, wh, bh)

    mean = slab[:B, :At]
    act = slab[:B, At:2 * At]
    lp = slab[:B, 2 * At:2 * At + 1]
    conc = slab[:B, 2 * At + 1:2 * At + 1 + Av]
    val = slab[:B, 2 * At + 1 + Av:2 * At + 2 + Av]
    return mean, act, lp, conc, val


def dirichlet_log_prob(x, conc):
    # TODO(synk): lgamma / gamma sampling have no clean Pallas TPU lowering; the Dirichlet
    # head stays in plain-JAX glue.
    return (
        jnp.sum((conc - 1.0) * jnp.log(x), axis=-1)
        + gammaln(jnp.sum(conc, axis=-1))
        - jnp.sum(gammaln(conc), axis=-1)
    )


def multihead_actor_critic_act(state, key, action_var, fused):
    """Full `act()` semantics: Pallas kernel for the network + Gaussian head,
    plain-JAX glue for the Dirichlet head."""
    k_eps, k_dir = jax.random.split(key)
    At = action_var.shape[-1]
    # TODO(synk): eps could be generated in-kernel (pltpu.prng_random_bits + Box-Muller) to
    # drop one small HBM input stream; kept host-side for deterministic reference checks.
    eps_top = jax.random.normal(k_eps, (state.shape[0], At), dtype=jnp.float32)

    top_mean, top_actions, top_lp, valve_conc, state_val = actor_critic_act_kernel(
        state, eps_top, action_var, fused)

    valve_actions = jax.random.dirichlet(k_dir, valve_conc)
    valve_lp = dirichlet_log_prob(valve_actions, valve_conc)

    return (
        top_actions,
        valve_actions,
        top_lp[:, 0],          # match torch: log_prob shape [B]
        valve_lp,
        state_val,             # [B, 1]
        top_mean,
        valve_conc,
    )


# ----------------------------------------------------------------------------
# Deterministic parameter initialization (synthetic, not a checkpoint load)
# ----------------------------------------------------------------------------
def init_params(key, state_dim, action_dim_top, action_dim_valve, hidden=64):
    def linear(k, fan_in, fan_out):
        kw, kb = jax.random.split(k)
        bound = 1.0 / math.sqrt(fan_in)
        w = jax.random.uniform(kw, (fan_in, fan_out), jnp.float32, -bound, bound)
        b = jax.random.uniform(kb, (1, fan_out), jnp.float32, -bound, bound)
        return w, b

    keys = jax.random.split(key, 7)
    p = {}
    p["w1"], p["b1"] = linear(keys[0], state_dim, hidden)
    p["w2"], p["b2"] = linear(keys[1], hidden, hidden)
    p["wt"], p["bt"] = linear(keys[2], hidden, action_dim_top)
    p["wv"], p["bv"] = linear(keys[3], hidden, action_dim_valve)
    p["wc1"], p["bc1"] = linear(keys[4], state_dim, hidden)
    p["wc2"], p["bc2"] = linear(keys[5], hidden, hidden)
    p["wc3"], p["bc3"] = linear(keys[6], hidden, 1)
    return p


# ----------------------------------------------------------------------------
# Pure-JAX reference (unfused, high-precision matmuls) for the sanity check
# ----------------------------------------------------------------------------
def _reference(state, eps, var, p):
    dot = functools.partial(jnp.dot, precision=jax.lax.Precision.HIGHEST)
    h = jnp.tanh(dot(state, p["w1"]) + p["b1"])
    h = jnp.tanh(dot(h, p["w2"]) + p["b2"])
    mean = jnp.tanh(dot(h, p["wt"]) + p["bt"])
    act = mean + jnp.sqrt(var) * eps
    lp = (-0.5 * jnp.sum(eps * eps, -1, keepdims=True)
          - 0.5 * eps.shape[-1] * _LOG_2PI
          - 0.5 * jnp.sum(jnp.log(var), -1, keepdims=True))
    conc = jax.nn.softplus(dot(h, p["wv"]) + p["bv"]) + 0.001
    c = jnp.tanh(dot(state, p["wc1"]) + p["bc1"])
    c = jnp.tanh(dot(c, p["wc2"]) + p["bc2"])
    val = dot(c, p["wc3"]) + p["bc3"]
    return mean, act, lp, conc, val


if __name__ == "__main__":
    # Small shapes consistent with the module's Linear layers.
    batch = 2
    state_dim = 8
    action_dim = {"top-level": 4, "valve-level": 6}
    action_std_init = 0.6

    root = jax.random.PRNGKey(0)
    k_params, k_state, k_act = jax.random.split(root, 3)

    params = init_params(k_params, state_dim, action_dim["top-level"], action_dim["valve-level"])
    fused = fuse_params(params)
    state = jax.random.normal(k_state, (batch, state_dim), dtype=jnp.float32)
    action_var = jnp.full((1, action_dim["top-level"]),
                          action_std_init * action_std_init, dtype=jnp.float32)

    outs = multihead_actor_critic_act(state, k_act, action_var, fused)
    outs = jax.block_until_ready(outs)
    (top_actions, valve_actions, top_lp, valve_lp, state_val, top_mean, valve_conc) = outs

    # correctness check against an unfused pure-JAX reference:
    #   f32 matmul path -> tight tolerance, bf16 matmul path (perf default) -> loose.
    eps_top = jax.random.normal(jax.random.split(k_act)[0],
                                (batch, action_dim["top-level"]), dtype=jnp.float32)
    ref = _reference(state, eps_top, action_var, params)
    names = ("mean", "action", "logprob", "concentration", "value")

    ker32 = actor_critic_act_kernel(state, eps_top, action_var, fused,
                                    matmul_dtype=jnp.float32)
    for name, r, k in zip(names, ref, ker32):
        assert r.shape == k.shape, (name, r.shape, k.shape)
        err = float(jnp.max(jnp.abs(r - k)))
        assert jnp.allclose(r, k, atol=1e-4, rtol=1e-3), (name, err)

    ker16 = actor_critic_act_kernel(state, eps_top, action_var, fused,
                                    matmul_dtype=jnp.bfloat16)
    for name, r, k in zip(names, ref, ker16):
        assert r.shape == k.shape, (name, r.shape, k.shape)
        err = float(jnp.max(jnp.abs(r - k)))
        assert jnp.allclose(r, k, atol=5e-2, rtol=5e-2), (name, err)

    # basic shape checks mirroring torch semantics
    assert top_actions.shape == (batch, action_dim["top-level"])
    assert valve_actions.shape == (batch, action_dim["valve-level"])
    assert top_lp.shape == (batch,)
    assert valve_lp.shape == (batch,)
    assert state_val.shape == (batch, 1)

    print("KERNEL_OK")
</pallas_src>

<mosaic_0001>
module attributes {stable_mosaic.version = 11 : i64} {
  func.func @_actor_critic_kernel(%arg0: i32, %arg1: memref<8x8xbf16, #tpu.memory_space<vmem>>, %arg2: memref<8x16xf32, #tpu.memory_space<vmem>>, %arg3: memref<1x16xf32, #tpu.memory_space<vmem>>, %arg4: memref<8x128xbf16, #tpu.memory_space<vmem>>, %arg5: memref<1x128xf32, #tpu.memory_space<vmem>>, %arg6: memref<128x128xbf16, #tpu.memory_space<vmem>>, %arg7: memref<1x128xf32, #tpu.memory_space<vmem>>, %arg8: memref<128x16xbf16, #tpu.memory_space<vmem>>, %arg9: memref<1x16xf32, #tpu.memory_space<vmem>>, %arg10: memref<8x16xf32, #tpu.memory_space<vmem>>) attributes {dimension_semantics = [#tpu.dimension_semantics<parallel>], iteration_bounds = array<i64: 1>, scalar_prefetch = 0 : i64, scratch_operands = 0 : i64, tpu.core_type = #tpu.core_type<tc>, window_params = [{transform_indices = @transform_0, window_bounds = array<i64: 8, 8>}, {transform_indices = @transform_1, window_bounds = array<i64: 8, 16>}, {pipeline_mode = #tpu.pipeline_mode<synchronous>, transform_indices = @transform_2, window_bounds = array<i64: 1, 16>}, {pipeline_mode = #tpu.pipeline_mode<synchronous>, transform_indices = @transform_3, window_bounds = array<i64: 8, 128>}, {pipeline_mode = #tpu.pipeline_mode<synchronous>, transform_indices = @transform_4, window_bounds = array<i64: 1, 128>}, {pipeline_mode = #tpu.pipeline_mode<synchronous>, transform_indices = @transform_5, window_bounds = array<i64: 128, 128>}, {pipeline_mode = #tpu.pipeline_mode<synchronous>, transform_indices = @transform_6, window_bounds = array<i64: 1, 128>}, {pipeline_mode = #tpu.pipeline_mode<synchronous>, transform_indices = @transform_7, window_bounds = array<i64: 128, 16>}, {pipeline_mode = #tpu.pipeline_mode<synchronous>, transform_indices = @transform_8, window_bounds = array<i64: 1, 16>}, {transform_indices = @transform_9, window_bounds = array<i64: 8, 16>}]} {
    %c0 = arith.constant 0 : index
    %c0_0 = arith.constant 0 : index
    %0 = vector.load %arg1[%c0, %c0_0] : memref<8x8xbf16, #tpu.memory_space<vmem>>, vector<8x8xbf16>
    %c0_1 = arith.constant 0 : index
    %c0_2 = arith.constant 0 : index
    %1 = vector.load %arg4[%c0_1, %c0_2] : memref<8x128xbf16, #tpu.memory_space<vmem>>, vector<8x128xbf16>
    %cst = arith.constant dense<0.000000e+00> : vector<8x128xf32>
    %2 = tpu.matmul %0, %1, %cst {dimension_numbers = #tpu.dot_dimension_numbers<[1], [0], [0], [1], [0, 0, 1, 1], [], []>} : vector<8x8xbf16>, vector<8x128xbf16>, vector<8x128xf32> -> vector<8x128xf32>
    %c0_3 = arith.constant 0 : index
    %c0_4 = arith.constant 0 : index
    %3 = vector.load %arg5[%c0_3, %c0_4] : memref<1x128xf32, #tpu.memory_space<vmem>>, vector<1x128xf32>
    %4 = vector.broadcast %3 : vector<1x128xf32> to vector<8x128xf32>
    %5 = arith.addf %2, %4 : vector<8x128xf32>
    %6 = math.tanh %5 : vector<8x128xf32>
    %7 = arith.truncf %6 : vector<8x128xf32> to vector<8x128xbf16>
    %c0_5 = arith.constant 0 : index
    %c0_6 = arith.constant 0 : index
    %8 = vector.load %arg6[%c0_5, %c0_6] : memref<128x128xbf16, #tpu.memory_space<vmem>>, vector<128x128xbf16>
    %cst_7 = arith.constant dense<0.000000e+00> : vector<8x128xf32>
    %9 = tpu.matmul %7, %8, %cst_7 {dimension_numbers = #tpu.dot_dimension_numbers<[1], [0], [0], [1], [0, 0, 1, 1], [], []>} : vector<8x128xbf16>, vector<128x128xbf16>, vector<8x128xf32> -> vector<8x128xf32>
    %c0_8 = arith.constant 0 : index
    %c0_9 = arith.constant 0 : index
    %10 = vector.load %arg7[%c0_8, %c0_9] : memref<1x128xf32, #tpu.memory_space<vmem>>, vector<1x128xf32>
    %11 = vector.broadcast %10 : vector<1x128xf32> to vector<8x128xf32>
    %12 = arith.addf %9, %11 : vector<8x128xf32>
    %13 = math.tanh %12 : vector<8x128xf32>
    %14 = arith.truncf %13 : vector<8x128xf32> to vector<8x128xbf16>
    %c0_10 = arith.constant 0 : index
    %c0_11 = arith.constant 0 : index
    %15 = vector.load %arg8[%c0_10, %c0_11] : memref<128x16xbf16, #tpu.memory_space<vmem>>, vector<128x16xbf16>
    %cst_12 = arith.constant dense<0.000000e+00> : vector<8x16xf32>
    %16 = tpu.matmul %14, %15, %cst_12 {dimension_numbers = #tpu.dot_dimension_numbers<[1], [0], [0], [1], [0, 0, 1, 1], [], []>} : vector<8x128xbf16>, vector<128x16xbf16>, vector<8x16xf32> -> vector<8x16xf32>
    %c0_13 = arith.constant 0 : index
    %c0_14 = arith.constant 0 : index
    %17 = vector.load %arg9[%c0_13, %c0_14] : memref<1x16xf32, #tpu.memory_space<vmem>>, vector<1x16xf32>
    %18 = vector.broadcast %17 : vector<1x16xf32> to vector<8x16xf32>
    %19 = arith.addf %16, %18 : vector<8x16xf32>
    %c0_15 = arith.constant 0 : index
    %c0_16 = arith.constant 0 : index
    %20 = vector.load %arg2[%c0_15, %c0_16] : memref<8x16xf32, #tpu.memory_space<vmem>>, vector<8x16xf32>
    %c0_17 = arith.constant 0 : index
    %c0_18 = arith.constant 0 : index
    %21 = vector.load %arg3[%c0_17, %c0_18] : memref<1x16xf32, #tpu.memory_space<vmem>>, vector<1x16xf32>
    %22 = tpu.iota {dimensions = array<i32: 1>} : vector<8x16xi32>
    %c8_i32 = arith.constant 8 : i32
    %23 = vector.broadcast %c8_i32 : i32 to vector<8x16xi32>
    %24 = arith.cmpi slt, %22, %23 : vector<8x16xi32>
    %25 = math.tanh %19 : vector<8x16xf32>
    %26 = arith.select %24, %25, %19 : vector<8x16xi1>, vector<8x16xf32>
    %27 = vector.broadcast %21 : vector<1x16xf32> to vector<8x16xf32>
    %28 = arith.mulf %20, %27 : vector<8x16xf32>
    %29 = arith.addf %26, %28 : vector<8x16xf32>
    %cst_19 = arith.constant 0.000000e+00 : f32
    %30 = vector.broadcast %cst_19 : f32 to vector<8x16xf32>
    %31 = arith.maximumf %19, %30 : vector<8x16xf32>
    %32 = math.absf %19 : vector<8x16xf32>
    %cst_20 = arith.constant 0.000000e+00 : f32
    %33 = vector.broadcast %cst_20 : f32 to vector<8x16xf32>
    %34 = arith.subf %33, %32 : vector<8x16xf32>
    %35 = math.exp %34 : vector<8x16xf32>
    %36 = math.log1p %35 : vector<8x16xf32>
    %37 = arith.addf %31, %36 : vector<8x16xf32>
    %cst_21 = arith.constant 1.000000e-03 : f32
    %38 = vector.broadcast %cst_21 : f32 to vector<8x16xf32>
    %39 = arith.addf %37, %38 : vector<8x16xf32>
    %c9_i32 = arith.constant 9 : i32
    %40 = vector.broadcast %c9_i32 : i32 to vector<8x16xi32>
    %41 = arith.cmpi sge, %22, %40 : vector<8x16xi32>
    %c15_i32 = arith.constant 15 : i32
    %42 = vector.broadcast %c15_i32 : i32 to vector<8x16xi32>
    %43 = arith.cmpi slt, %22, %42 : vector<8x16xi32>
    %44 = arith.andi %41, %43 : vector<8x16xi1>
    %45 = arith.select %44, %39, %29 : vector<8x16xi1>, vector<8x16xf32>
    %46 = arith.mulf %20, %20 : vector<8x16xf32>
    %cst_22 = arith.constant dense<0.000000e+00> : vector<8xf32>
    %47 = vector.multi_reduction <add>, %46, %cst_22 [1] : vector<8x16xf32> to vector<8xf32>
    %48 = vector.shape_cast %47 : vector<8xf32> to vector<8x1xf32>
    %cst_23 = arith.constant -5.000000e-01 : f32
    %49 = vector.broadcast %cst_23 : f32 to vector<8x1xf32>
    %50 = arith.mulf %49, %48 : vector<8x1xf32>
    %51 = vector.extract_strided_slice %21 {offsets = [0, 8], sizes = [1, 1], strides = [1, 1]} : vector<1x16xf32> to vector<1x1xf32>
    %52 = vector.broadcast %51 : vector<1x1xf32> to vector<8x1xf32>
    %53 = arith.addf %50, %52 : vector<8x1xf32>
    %c8_i32_24 = arith.constant 8 : i32
    %54 = vector.broadcast %c8_i32_24 : i32 to vector<8x16xi32>
    %55 = arith.cmpi eq, %22, %54 : vector<8x16xi32>
    %56 = vector.shape_cast %53 : vector<8x1xf32> to vector<8x1xf32>
    %57 = vector.broadcast %56 : vector<8x1xf32> to vector<8x16xf32>
    %58 = arith.select %55, %57, %45 : vector<8x16xi1>, vector<8x16xf32>
    %c0_25 = arith.constant 0 : index
    %c0_26 = arith.constant 0 : index
    %59 = vector.load %arg10[%c0_25, %c0_26] : memref<8x16xf32, #tpu.memory_space<vmem>>, vector<8x16xf32>
    tpu.vector_store %arg10[%c0_25, %c0_26], %58 {strides = array<i32>} : memref<8x16xf32, #tpu.memory_space<vmem>>, vector<8x16xf32>,
    return
  }
  func.func @transform_0(%arg0: i32) -> (i32, i32) {
    %c0_i32 = arith.constant 0 : i32
    %c0_i32_0 = arith.constant 0 : i32
    return %arg0, %c0_i32 : i32, i32
  }
  func.func @transform_1(%arg0: i32) -> (i32, i32) {
    %c0_i32 = arith.constant 0 : i32
    %c0_i32_0 = arith.constant 0 : i32
    return %arg0, %c0_i32 : i32, i32
  }
  func.func @transform_2(%arg0: i32) -> (i32, i32) {
    %c0_i32 = arith.constant 0 : i32
    %c0_i32_0 = arith.constant 0 : i32
    %c0_i32_1 = arith.constant 0 : i32
    return %c0_i32, %c0_i32_0 : i32, i32
  }
  func.func @transform_3(%arg0: i32) -> (i32, i32) {
    %c0_i32 = arith.constant 0 : i32
    %c0_i32_0 = arith.constant 0 : i32
    %c0_i32_1 = arith.constant 0 : i32
    return %c0_i32, %c0_i32_0 : i32, i32
  }
  func.func @transform_4(%arg0: i32) -> (i32, i32) {
    %c0_i32 = arith.constant 0 : i32
    %c0_i32_0 = arith.constant 0 : i32
    %c0_i32_1 = arith.constant 0 : i32
    return %c0_i32, %c0_i32_0 : i32, i32
  }
  func.func @transform_5(%arg0: i32) -> (i32, i32) {
    %c0_i32 = arith.constant 0 : i32
    %c0_i32_0 = arith.constant 0 : i32
    %c0_i32_1 = arith.constant 0 : i32
    return %c0_i32, %c0_i32_0 : i32, i32
  }
  func.func @transform_6(%arg0: i32) -> (i32, i32) {
    %c0_i32 = arith.constant 0 : i32
    %c0_i32_0 = arith.constant 0 : i32
    %c0_i32_1 = arith.constant 0 : i32
    return %c0_i32, %c0_i32_0 : i32, i32
  }
  func.func @transform_7(%arg0: i32) -> (i32, i32) {
    %c0_i32 = arith.constant 0 : i32
    %c0_i32_0 = arith.constant 0 : i32
    %c0_i32_1 = arith.constant 0 : i32
    return %c0_i32, %c0_i32_0 : i32, i32
  }
  func.func @transform_8(%arg0: i32) -> (i32, i32) {
    %c0_i32 = arith.constant 0 : i32
    %c0_i32_0 = arith.constant 0 : i32
    %c0_i32_1 = arith.constant 0 : i32
    return %c0_i32, %c0_i32_0 : i32, i32
  }
  func.func @transform_9(%arg0: i32) -> (i32, i32) {
    %c0_i32 = arith.constant 0 : i32
    %c0_i32_0 = arith.constant 0 : i32
    return %arg0, %c0_i32 : i32, i32
  }
}

</mosaic_0001>

<llo_original>
// kernel: tpu_custom_call.1
$region0: #{tpu_custom_call.1}
  #allocation0 [shape = 'u32[]', space=smem, size = 0x4, offset = 0x4, fixed_abs, tag = 'smem constant byte address 0x4 - core index']
  #allocation1 [shape = 'u32[144,128]{1,0:T(1,128)}', space=vmem, size = 0x12000, scoped, tag = 'internal scratch']
  %s0 = inlined_call_operand.vmem [shape: bf16[8,8], index: 0, kind: input, shape index: {}]
  %s1 = inlined_call_operand.vmem [shape: f32[8,16], index: 1, kind: input, shape index: {}]
  %s2 = inlined_call_operand.vmem [shape: f32[1,16], index: 2, kind: input, shape index: {}]
  %s3 = inlined_call_operand.vmem [shape: bf16[8,128], index: 3, kind: input, shape index: {}]
  %s4 = inlined_call_operand.vmem [shape: f32[1,128], index: 4, kind: input, shape index: {}]
  %s5 = inlined_call_operand.vmem [shape: bf16[128,128], index: 5, kind: input, shape index: {}]
  %s6 = inlined_call_operand.vmem [shape: f32[1,128], index: 6, kind: input, shape index: {}]
  %s7 = inlined_call_operand.vmem [shape: bf16[128,16], index: 7, kind: input, shape index: {}]
  %s8 = inlined_call_operand.vmem [shape: f32[1,16], index: 8, kind: input, shape index: {}]
  %s9 = inlined_call_operand.hbm [shape: f32[8,16], index: 9, kind: output, shape index: {}]
  %s10 = sld [smem:[#allocation0]]
  $region46: #{tpu_custom_call.1} parent=0
    _
  %s12 = ssub.s32 1, %s10
  %s13 = scalar_select 0, %s12, %s10
  $region1: #{tpu_custom_call.1} parent=0
    #allocation2 [shape = 'u8[4096]{0}', space=vmem, size = 0x1000, scoped, tag = 'output window, operand 0, single buffered']
    #allocation3 [shape = 's32[1]{0}', space=sflag, size = 0x4, scoped, tag = 'scoped memory for tpu_custom_call.1']
    %14 = vsyncpa [#allocation3], 0
    // Predicated region
    $region2: #{tpu_custom_call.1} parent=1 // pred_check
      _
    $region3: #{tpu_custom_call.1} parent=1 // pred_check_branch
      %16 = sbr.rel (0) target = $region5
    $region4: #{tpu_custom_call.1} parent=1 // pred_region
      _
    $region5: #{tpu_custom_call.1} parent=1 // pred_fallthru
      _
    // Predicated region
    $region6: #{tpu_custom_call.1} parent=1 // pred_check
      _
    $region7: #{tpu_custom_call.1} parent=1 // pred_check_branch
      %18 = sbr.rel (0) target = $region9
    $region8: #{tpu_custom_call.1} parent=1 // pred_region
      _
    $region9: #{tpu_custom_call.1} parent=1 // pred_fallthru
      _
    // Predicated region
    $region10: #{tpu_custom_call.1} parent=1 // pred_check
      _
    $region11: #{tpu_custom_call.1} parent=1 // pred_check_branch
      %20 = sbr.rel (0) target = $region13
    $region12: #{tpu_custom_call.1} parent=1 // pred_region
      _
    $region13: #{tpu_custom_call.1} parent=1 // pred_fallthru
      _
    // Predicated region
    $region14: #{tpu_custom_call.1} parent=1 // pred_check
      _
    $region15: #{tpu_custom_call.1} parent=1 // pred_check_branch
      %22 = sbr.rel (0) target = $region17
    $region16: #{tpu_custom_call.1} parent=1 // pred_region
      _
    $region17: #{tpu_custom_call.1} parent=1 // pred_fallthru
      _
    // Predicated region
    $region18: #{tpu_custom_call.1} parent=1 // pred_check
      _
    $region19: #{tpu_custom_call.1} parent=1 // pred_check_branch
      %24 = sbr.rel (0) target = $region21
    $region20: #{tpu_custom_call.1} parent=1 // pred_region
      _
    $region21: #{tpu_custom_call.1} parent=1 // pred_fallthru
      _
    // Predicated region
    $region22: #{tpu_custom_call.1} parent=1 // pred_check
      _
    $region23: #{tpu_custom_call.1} parent=1 // pred_check_branch
      %26 = sbr.rel (0) target = $region25
    $region24: #{tpu_custom_call.1} parent=1 // pred_region
      _
    $region25: #{tpu_custom_call.1} parent=1 // pred_fallthru
      _
    // Predicated region
    $region26: #{tpu_custom_call.1} parent=1 // pred_check
      _
    $region27: #{tpu_custom_call.1} parent=1 // pred_check_branch
      %28 = sbr.rel (0) target = $region29
    $region28: #{tpu_custom_call.1} parent=1 // pred_region
      _
    $region29: #{tpu_custom_call.1} parent=1 // pred_fallthru
      _
    // Predicated region
    $region30: #{tpu_custom_call.1} parent=1 // pred_check
      _
    $region31: #{tpu_custom_call.1} parent=1 // pred_check_branch
      %30 = sbr.rel (0) target = $region33
    $region32: #{tpu_custom_call.1} parent=1 // pred_region
      _
    $region33: #{tpu_custom_call.1} parent=1 // pred_fallthru
      _
    // Predicated region
    $region34: #{tpu_custom_call.1} parent=1 // pred_check
      _
    $region35: #{tpu_custom_call.1} parent=1 // pred_check_branch
      %32 = sbr.rel (0) target = $region37
    $region36: #{tpu_custom_call.1} parent=1 // pred_region
      _
    $region37: #{tpu_custom_call.1} parent=1 // pred_fallthru
      _
    %v34 = vld [vmem:[%s0] sm:$0xf]
    %v35 = vld [vmem:[%s3] sm:$0xf]
    %v36 = vld [vmem:[%s4] sm:$0x1]
    %v38 = vlaneseq
    %v39 = vshrl.u32 %v38, 7
    %v40 = vsub.s32 0, %v39
    %v41 = vrot.slane %v36, %v40
    %vm43 = vcmask 64512
    %v45 = vsel %vm43, %v34, 0
    %vm47 = vcmask 1043456
    %v49 = vsel %vm47, %v35, 0
    %51 = vmatprep.subr.bf16.mxu0 0
    %52 = vmatpush1.bf16.msra.mxu0 %v49
    %53 = vmatprep.subr.bf16.mxu0 0
    %54 = vmatpush1.bf16.msra.mxu0 0
    %55 = vmatprep.subr.bf16.mxu0 0
    %56 = vmatpush1.bf16.msra.mxu0 0
    %57 = vmatprep.subr.bf16.mxu0 0
    %58 = vmatpush1.bf16.msra.mxu0 0
    %59 = vmatprep.subr.bf16.mxu0 0
    %60 = vmatpush1.bf16.msra.mxu0 0
    %61 = vmatprep.subr.bf16.mxu0 0
    %62 = vmatpush1.bf16.msra.mxu0 0
    %63 = vmatprep.subr.bf16.mxu0 0
    %64 = vmatpush1.bf16.msra.mxu0 0
    %65 = vmatprep.subr.bf16.mxu0 0
    %66 = vmatpush1.bf16.msra.mxu0 0
    %67 = vmatprep.subr.bf16.mxu0 0
    %68 = vmatpush1.bf16.msra.mxu0 0
    %69 = vmatprep.subr.bf16.mxu0 0
    %70 = vmatpush1.bf16.msra.mxu0 0
    %71 = vmatprep.subr.bf16.mxu0 0
    %72 = vmatpush1.bf16.msra.mxu0 0
    %73 = vmatprep.subr.bf16.mxu0 0
    %74 = vmatpush1.bf16.msra.mxu0 0
    %75 = vmatprep.subr.bf16.mxu0 0
    %76 = vmatpush1.bf16.msra.mxu0 0
    %77 = vmatprep.subr.bf16.mxu0 0
    %78 = vmatpush1.bf16.msra.mxu0 0
    %79 = vmatprep.subr.bf16.mxu0 0
    %80 = vmatpush1.bf16.msra.mxu0 0
    %81 = vmatprep.subr.bf16.mxu0 0
    %82 = vmatpush1.bf16.msra.mxu0 0
    %83 = vmatprep.mubr.bf16.mxu0 0
    %84 = vmatmul.mubr.bf16.gmra.mrb[0].mxu0 %v45
    %v85 = vpop.f32.mrb[0].mxu0
    %v86 = vadd.f32 %v41, %v85
    %v87 = vpop.f32.mrb[0].mxu0
    %v88 = vpop.f32.mrb[0].mxu0
    %v89 = vpop.f32.mrb[0].mxu0
    %90 = vdwg.mxu0
    %v91 = vtanh.pop %v86
    %v92 = vpack.c.bf16 %v91, %v91
    %v93 = vld [vmem:[%s5] sm:$0xf]
    %v94 = vld [vmem:[%s5 + $0x4] sm:$0xf]
    %v95 = vld [vmem:[%s5 + $0x8] sm:$0xf]
    %v96 = vld [vmem:[%s5 + $0xc] sm:$0xf]
    %v97 = vld [vmem:[%s5 + $0x10] sm:$0xf]
    %v98 = vld [vmem:[%s5 + $0x14] sm:$0xf]
    %v99 = vld [vmem:[%s5 + $0x18] sm:$0xf]
    %v100 = vld [vmem:[%s5 + $0x1c] sm:$0xf]
    %v101 = vld [vmem:[%s5 + $0x20] sm:$0xf]
    %v102 = vld [vmem:[%s5 + $0x24] sm:$0xf]
    %v103 = vld [vmem:[%s5 + $0x28] sm:$0xf]
    %v104 = vld [vmem:[%s5 + $0x2c] sm:$0xf]
    %v105 = vld [vmem:[%s5 + $0x30] sm:$0xf]
    %v106 = vld [vmem:[%s5 + $0x34] sm:$0xf]
    %v107 = vld [vmem:[%s5 + $0x38] sm:$0xf]
    %v108 = vld [vmem:[%s5 + $0x3c] sm:$0xf]
    %v109 = vld [vmem:[%s6] sm:$0x1]
    %v111 = vlaneseq
    %v112 = vshrl.u32 %v111, 7
    %v113 = vsub.s32 0, %v112
    %v114 = vrot.slane %v109, %v113
    %v132 = vunpack.c.l.b16 %v93
    %v133 = vunpack.c.l.b16 %v94
    %v134 = vunpack.c.l.b16 %v95
    %v135 = vunpack.c.l.b16 %v96
    %v136 = vunpack.c.l.b16 %v97
    %v137 = vunpack.c.l.b16 %v98
    %v138 = vunpack.c.l.b16 %v99
    %v139 = vunpack.c.l.b16 %v100
    %v140 = vunpack.c.l.b16 %v101
    %v141 = vunpack.c.l.b16 %v102
    %v142 = vunpack.c.l.b16 %v103
    %v143 = vunpack.c.l.b16 %v104
    %v144 = vunpack.c.l.b16 %v105
    %v145 = vunpack.c.l.b16 %v106
    %v146 = vunpack.c.l.b16 %v107
    %v147 = vunpack.c.l.b16 %v108
    %v148 = vpack.c.b16 %v133, %v132
    %v149 = vpack.c.b16 %v135, %v134
    %v150 = vpack.c.b16 %v137, %v136
    %v151 = vpack.c.b16 %v139, %v138
    %v152 = vpack.c.b16 %v141, %v140
    %v153 = vpack.c.b16 %v143, %v142
    %v154 = vpack.c.b16 %v145, %v144
    %v155 = vpack.c.b16 %v147, %v146
    %164 = vmatprep.subr.bf16.mxu0 0
    %165 = vmatpush1.bf16.msra.mxu0 %v148
    %166 = vmatprep.subr.bf16.mxu0 0
    %167 = vmatpush1.bf16.msra.mxu0 %v149
    %168 = vmatprep.subr.bf16.mxu0 0
    %169 = vmatpush1.bf16.msra.mxu0 %v150
    %170 = vmatprep.subr.bf16.mxu0 0
    %171 = vmatpush1.bf16.msra.mxu0 %v151
    %172 = vmatprep.subr.bf16.mxu0 0
    %173 = vmatpush1.bf16.msra.mxu0 %v152
    %174 = vmatprep.subr.bf16.mxu0 0
    %175 = vmatpush1.bf16.msra.mxu0 %v153
    %176 = vmatprep.subr.bf16.mxu0 0
    %177 = vmatpush1.bf16.msra.mxu0 %v154
    %178 = vmatprep.subr.bf16.mxu0 0
    %179 = vmatpush1.bf16.msra.mxu0 %v155
    %180 = vmatprep.subr.bf16.mxu0 0
    %181 = vmatpush1.bf16.msra.mxu0 0
    %182 = vmatprep.subr.bf16.mxu0 0
    %183 = vmatpush1.bf16.msra.mxu0 0
    %184 = vmatprep.subr.bf16.mxu0 0
    %185 = vmatpush1.bf16.msra.mxu0 0
    %186 = vmatprep.subr.bf16.mxu0 0
    %187 = vmatpush1.bf16.msra.mxu0 0
    %188 = vmatprep.subr.bf16.mxu0 0
    %189 = vmatpush1.bf16.msra.mxu0 0
    %190 = vmatprep.subr.bf16.mxu0 0
    %191 = vmatpush1.bf16.msra.mxu0 0
    %192 = vmatprep.subr.bf16.mxu0 0
    %193 = vmatpush1.bf16.msra.mxu0 0
    %194 = vmatprep.subr.bf16.mxu0 0
    %195 = vmatpush1.bf16.msra.mxu0 0
    %196 = vmatprep.mubr.bf16.mxu0 0
    %197 = vmatmul.mubr.bf16.gmra.mrb[0].mxu0 %v92
    %v198 = vpop.f32.mrb[0].mxu0
    %v199 = vadd.f32 %v114, %v198
    %v200 = vpop.f32.mrb[0].mxu0
    %v201 = vpop.f32.mrb[0].mxu0
    %v202 = vpop.f32.mrb[0].mxu0
    %203 = vdwg.mxu0
    %v204 = vtanh.pop %v199
    %v205 = vpack.c.bf16 %v204, %v204
    %v206 = vld [vmem:[%s7] sm:$0xf]
    %v207 = vld [vmem:[%s7 + $0x4] sm:$0xf]
    %v208 = vld [vmem:[%s7 + $0x8] sm:$0xf]
    %v209 = vld [vmem:[%s7 + $0xc] sm:$0xf]
    %v210 = vld [vmem:[%s7 + $0x10] sm:$0xf]
    %v211 = vld [vmem:[%s7 + $0x14] sm:$0xf]
    %v212 = vld [vmem:[%s7 + $0x18] sm:$0xf]
    %v213 = vld [vmem:[%s7 + $0x1c] sm:$0xf]
    %v214 = vld [vmem:[%s7 + $0x20] sm:$0xf]
    %v215 = vld [vmem:[%s7 + $0x24] sm:$0xf]
    %v216 = vld [vmem:[%s7 + $0x28] sm:$0xf]
    %v217 = vld [vmem:[%s7 + $0x2c] sm:$0xf]
    %v218 = vld [vmem:[%s7 + $0x30] sm:$0xf]
    %v219 = vld [vmem:[%s7 + $0x34] sm:$0xf]
    %v220 = vld [vmem:[%s7 + $0x38] sm:$0xf]
    %v221 = vld [vmem:[%s7 + $0x3c] sm:$0xf]
    %v222 = vld [vmem:[%s8] sm:$0x1]
    %v224 = vlaneseq
    %v225 = vshrl.u32 %v224, 7
    %v226 = vsub.s32 0, %v225
    %v227 = vrot.slane %v222, %v226
    %v245 = vunpack.c.l.b16 %v206
    %v246 = vunpack.c.l.b16 %v207
    %v247 = vunpack.c.l.b16 %v208
    %v248 = vunpack.c.l.b16 %v209
    %v249 = vunpack.c.l.b16 %v210
    %v250 = vunpack.c.l.b16 %v211
    %v251 = vunpack.c.l.b16 %v212
    %v252 = vunpack.c.l.b16 %v213
    %v253 = vunpack.c.l.b16 %v214
    %v254 = vunpack.c.l.b16 %v215
    %v255 = vunpack.c.l.b16 %v216
    %v256 = vunpack.c.l.b16 %v217
    %v257 = vunpack.c.l.b16 %v218
    %v258 = vunpack.c.l.b16 %v219
    %v259 = vunpack.c.l.b16 %v220
    %v260 = vunpack.c.l.b16 %v221
    %v261 = vpack.c.b16 %v246, %v245
    %v262 = vpack.c.b16 %v248, %v247
    %v263 = vpack.c.b16 %v250, %v249
    %v264 = vpack.c.b16 %v252, %v251
    %v265 = vpack.c.b16 %v254, %v253
    %v266 = vpack.c.b16 %v256, %v255
    %v267 = vpack.c.b16 %v258, %v257
    %v268 = vpack.c.b16 %v260, %v259
    %277 = vmatprep.subr.bf16.mxu0 0
    %278 = vmatpush1.bf16.msra.mxu0 %v261
    %279 = vmatprep.subr.bf16.mxu0 0
    %280 = vmatpush1.bf16.msra.mxu0 %v262
    %281 = vmatprep.subr.bf16.mxu0 0
    %282 = vmatpush1.bf16.msra.mxu0 %v263
    %283 = vmatprep.subr.bf16.mxu0 0
    %284 = vmatpush1.bf16.msra.mxu0 %v264
    %285 = vmatprep.subr.bf16.mxu0 0
    %286 = vmatpush1.bf16.msra.mxu0 %v265
    %287 = vmatprep.subr.bf16.mxu0 0
    %288 = vmatpush1.bf16.msra.mxu0 %v266
    %289 = vmatprep.subr.bf16.mxu0 0
    %290 = vmatpush1.bf16.msra.mxu0 %v267
    %291 = vmatprep.subr.bf16.mxu0 0
    %292 = vmatpush1.bf16.msra.mxu0 %v268
    %293 = vmatprep.subr.bf16.mxu0 0
    %294 = vmatpush1.bf16.msra.mxu0 0
    %295 = vmatprep.subr.bf16.mxu0 0
    %296 = vmatpush1.bf16.msra.mxu0 0
    %297 = vmatprep.subr.bf16.mxu0 0
    %298 = vmatpush1.bf16.msra.mxu0 0
    %299 = vmatprep.subr.bf16.mxu0 0
    %300 = vmatpush1.bf16.msra.mxu0 0
    %301 = vmatprep.subr.bf16.mxu0 0
    %302 = vmatpush1.bf16.msra.mxu0 0
    %303 = vmatprep.subr.bf16.mxu0 0
    %304 = vmatpush1.bf16.msra.mxu0 0
    %305 = vmatprep.subr.bf16.mxu0 0
    %306 = vmatpush1.bf16.msra.mxu0 0
    %307 = vmatprep.subr.bf16.mxu0 0
    %308 = vmatpush1.bf16.msra.mxu0 0
    %309 = vmatprep.mubr.bf16.mxu0 0
    %310 = vmatmul.mubr.bf16.gmra.mrb[0].mxu0 %v205
    %v311 = vpop.f32.mrb[0].mxu0
    %v312 = vadd.f32 %v227, %v311
    %v313 = vpop.f32.mrb[0].mxu0
    %v314 = vpop.f32.mrb[0].mxu0
    %v315 = vpop.f32.mrb[0].mxu0
    %316 = vdwg.mxu0
    %v317 = vld [vmem:[%s1] sm:$0xff]
    %v318 = vld [vmem:[%s2] sm:$0x1]
    %v319 = vlaneseq
    %v320 = vand.u32 %v319, 127
    %vm321 = vcmp.lt.s32.totalorder %v320, 8
    %v322 = vtanh.pop %v312
    %v323 = vsel %vm321, %v322, %v312
    %v325 = vlaneseq
    %v326 = vshrl.u32 %v325, 7
    %v327 = vsub.s32 0, %v326
    %v328 = vrot.slane %v318, %v327
    %v330 = vmul.f32 %v317, %v328
    %v331 = vadd.f32 %v323, %v330
    %v332 = vmax.f32 %v312, 0.0
    %v333 = vand.u32 2147483647, %v312
    %v334 = vsub.f32 0.0, %v333
    %v335 = vmul.f32 %v334, 1.442695
    %v336 = vpow.pop %v335
    %v337 = vadd.f32 %v336, 1.0
    %v338 = vlog2.pop %v337
    %v339 = vmul.f32 %v338, 0.6931472
    %v340 = vmul.f32 -0.5, %v336
    %v341 = vadd.f32 %v340, 1.0
    %v342 = vmul.f32 %v341, %v336
    %v343 = vand.u32 2147483647, %v336
    %vm344 = vcmp.lt.f32.partialorder %v343, 0.0004427343
    %v345 = vsel %vm344, %v342, %v339
    %v346 = vadd.f32 %v332, %v345
    %v347 = vadd.f32 %v346, 0.001
    %vm348 = vcmp.ge.s32.totalorder %v320, 9
    %vm349 = vcmp.lt.s32.totalorder %v320, 15
    %vm350 = vmand %vm348, %vm349
    %v351 = vsel %vm350, %v347, %v331
    %v352 = vmul.f32 %v317, %v317
    %vm353 = vcmask 130048
    %v354 = vsel %vm353, %v352, 0.0
    %355 = vadd.xlane.f32.xlu0 %v354
    %v356 = vpop.xlane.xlu0 %355
    %v357 = vmul.f32 %v356, -0.5
    %v358 = vadd.f32 %v357, %v328
    %vm359 = vcmp.eq.s32.totalorder %v320, 8
    %361 = vset.pattern.permute.xlu0 8
    %362 = vperm.xlu0 %361, %v358
    %v363 = vpop.permute.xlu0 %362
    %v365 = vsel %vm359, %v363, %v351
    %366 = vst.msk [vmem:[#allocation2] sm:$0xff] %vm353, %v365
    // Predicated region
    $region38: #{tpu_custom_call.1} parent=1 // pred_check
      _
    $region39: #{tpu_custom_call.1} parent=1 // pred_check_branch
      %368 = sbr.rel (0) target = $region41
    $region40: #{tpu_custom_call.1} parent=1 // pred_region
      %s370 = ssub.s32 128, 128
      %371 = vsyncadd [#allocation3], %s370
      %s373 = sshll.u32 [#allocation2], 4
      %s374 = int_to_ptr.vmem [resolvable:$true] %s373
      %376 = dma.vmem_to_hbm [thread:$0]  %s374, 128, %s9, [#allocation3]
    $region41: #{tpu_custom_call.1} parent=1 // pred_fallthru
      _
    // Predicated region
    $region42: #{tpu_custom_call.1} parent=1 // pred_check
      _
    $region43: #{tpu_custom_call.1} parent=1 // pred_check_branch
      %378 = sbr.rel (0) target = $region45
    $region44: #{tpu_custom_call.1} parent=1 // pred_region
      %379 = dma.done [#allocation3], 128
    $region45: #{tpu_custom_call.1} parent=1 // pred_fallthru
      _
    %380 = vsyncpa [#allocation3], 1

</llo_original>
